<compile_context>
chip_gen: v7x
topology: tpu7x:2x2x1
jax: 0.10.0
libtpu: 0.0.40
codegen_flags: <defaults>
</compile_context>

<pallas_src>
import math

import jax
import jax.numpy as jnp
from jax import lax
from jax.experimental import pallas as pl
from jax.experimental.pallas import tpu as pltpu


def _noise_kernel(seed_ref, coef_ref, x_ref, o_ref):
    rows, width = x_ref.shape          # static block shape
    half = rows // 2                   # rows is always a multiple of 8

    seed = seed_ref[0].astype(jnp.uint32)
    base_row = (pl.program_id(0) * rows).astype(jnp.uint32)

    # ---- counter-based hash PRNG (tiling-independent, deterministic) ----
    r_iota = lax.broadcasted_iota(jnp.int32, (half, width), 0).astype(jnp.uint32)
    c_iota = lax.broadcasted_iota(jnp.int32, (half, width), 1).astype(jnp.uint32)
    idx = (base_row + r_iota) * jnp.uint32(width) + c_iota

    def fmix(v):  # murmur3 finalizer
        v = v ^ jnp.right_shift(v, 16)
        v = v * jnp.uint32(0x85EBCA6B)
        v = v ^ jnp.right_shift(v, 13)
        v = v * jnp.uint32(0xC2B2AE35)
        v = v ^ jnp.right_shift(v, 16)
        return v

    h = fmix(idx * jnp.uint32(0x9E3779B1) + seed)
    b1 = fmix(h ^ jnp.uint32(0x68BC21EB))
    b2 = fmix(h ^ jnp.uint32(0x02E5BE93))

    # top 24 bits -> uniform in the open interval (0, 1)
    inv24 = jnp.float32(1.0 / 16777216.0)
    u1 = (jnp.right_shift(b1, 8).astype(jnp.int32).astype(jnp.float32) + 0.5) * inv24
    u2 = (jnp.right_shift(b2, 8).astype(jnp.int32).astype(jnp.float32) + 0.5) * inv24

    # ---- Box-Muller, both branches (one (u1,u2) pair -> two normals) ----
    r = jnp.sqrt(jnp.float32(-2.0) * jnp.log(u1))
    theta = jnp.float32(2.0 * math.pi) * u2
    z_cos = r * jnp.cos(theta)
    z_sin = r * jnp.sin(theta)

    coef = coef_ref[...]               # (1, width) f32, broadcasts over rows

    x_top = x_ref[pl.ds(0, half), :].astype(jnp.float32)
    x_bot = x_ref[pl.ds(half, half), :].astype(jnp.float32)
    o_ref[pl.ds(0, half), :] = (x_top + z_cos * coef).astype(o_ref.dtype)
    o_ref[pl.ds(half, half), :] = (x_bot + z_sin * coef).astype(o_ref.dtype)


def _round_up(v, m):
    return (v + m - 1) // m * m


def _choose_width(d):
    """Widen small d to a lane-dense last-axis width (multiple of d)."""
    if d % 128 == 0 or d >= 512:
        return d, 1
    lcm = d * 128 // math.gcd(d, 128)
    if lcm <= 2048:
        return lcm, lcm // d           # multiple of 128 -> unmasked stores
    k = -(-128 // d)                   # fallback: at least 128 lanes wide
    return d * k, k


def scaled_diagonal_noise(x, param_trans, scales, seed):
    """x: any shape with last axis == len(scales). Returns x + N(0,1)*softplus(param)*scales."""
    orig_shape = x.shape
    orig_dtype = x.dtype
    d = scales.shape[0]
    assert orig_shape[-1] == d, "last axis of x must equal len(scales)"

    width, k = _choose_width(d)

    # Fold softplus(param) into the per-lane coefficient once (scalar/1-D work).
    sigma = jnp.log1p(jnp.exp(jnp.asarray(param_trans, jnp.float32)))
    coef = sigma * scales.astype(jnp.float32)            # (d,)
    coef_tiled = jnp.tile(coef, k).reshape(1, width)      # (1, width), width % d == 0

    total = int(x.size)
    rows = -(-total // width)

    # Row tile: multiple of 8, capped so each pipelined buffer stays ~<= 1 MiB.
    itemsize = max(jnp.dtype(orig_dtype).itemsize, 4)
    cap = max(8, ((1 << 20) // (width * itemsize)) // 8 * 8)
    block_rows = min(1024, cap)
    if rows <= block_rows:
        block_rows = _round_up(rows, 8)
    rows_padded = _round_up(rows, block_rows)
    grid = rows_padded // block_rows

    x_flat = x.reshape(-1)
    pad = rows_padded * width - total
    if pad:
        x_flat = jnp.concatenate([x_flat, jnp.zeros((pad,), orig_dtype)])
    x2 = x_flat.reshape(rows_padded, width)

    seed_arr = jnp.asarray([seed], dtype=jnp.int32)

    out = pl.pallas_call(
        _noise_kernel,
        out_shape=jax.ShapeDtypeStruct((rows_padded, width), orig_dtype),
        grid=(grid,),
        in_specs=[
            pl.BlockSpec(memory_space=pltpu.MemorySpace.SMEM),        # seed (scalar)
            pl.BlockSpec((1, width), lambda i: (0, 0)),               # coef, resident
            pl.BlockSpec((block_rows, width), lambda i: (i, 0)),      # x row tile
        ],
        out_specs=pl.BlockSpec((block_rows, width), lambda i: (i, 0)),
        compiler_params=pltpu.CompilerParams(
            dimension_semantics=("parallel",)),   # tiles independent -> megacore OK
    )(seed_arr, coef_tiled, x2)

    out_flat = out.reshape(-1)
    if pad:
        out_flat = out_flat[:total]
    return out_flat.reshape(orig_shape)


if __name__ == "__main__":
    key = jax.random.PRNGKey(0)

    # Module shapes: x = [batch, seq, dim], scales = [dim], param = scalar std.
    batch, seq, dim = 2, 8, 32
    x = jax.random.normal(key, (batch, seq, dim), dtype=jnp.float32)

    # Deterministic parameter init (mirrors __init__: store softplus_inv(std)).
    std = jnp.float32(0.5)
    param_trans = jnp.log(jnp.exp(std) - 1.0)             # inverse softplus
    scales = jnp.linspace(0.5, 1.5, dim).astype(jnp.float32)

    y = scaled_diagonal_noise(x, param_trans, scales, seed=1234)
    jax.block_until_ready(y)

    assert y.shape == x.shape and y.dtype == x.dtype
    assert bool(jnp.all(jnp.isfinite(y)))

    # Loose sanity check: extracted noise should be ~N(0, 1).
    sigma = jnp.log1p(jnp.exp(param_trans))
    z_est = (y - x) / (sigma * scales)
    assert abs(float(jnp.mean(z_est))) < 0.3
    assert 0.5 < float(jnp.std(z_est)) < 1.5

    print("KERNEL_OK")
</pallas_src>

<mosaic_0001>
module attributes {stable_mosaic.version = 11 : i64} {
  func.func @_noise_kernel(%arg0: i32, %arg1: memref<1xi32, #tpu.memory_space<smem>>, %arg2: memref<1x128xf32, #tpu.memory_space<vmem>>, %arg3: memref<8x128xf32, #tpu.memory_space<vmem>>, %arg4: memref<8x128xf32, #tpu.memory_space<vmem>>) attributes {dimension_semantics = [#tpu.dimension_semantics<parallel>], iteration_bounds = array<i64: 1>, scalar_prefetch = 0 : i64, scratch_operands = 0 : i64, tpu.core_type = #tpu.core_type<tc>, window_params = [{transform_indices = @transform_0, window_bounds = array<i64: 1>}, {pipeline_mode = #tpu.pipeline_mode<synchronous>, transform_indices = @transform_1, window_bounds = array<i64: 1, 128>}, {transform_indices = @transform_2, window_bounds = array<i64: 8, 128>}, {transform_indices = @transform_3, window_bounds = array<i64: 8, 128>}]} {
    %c0 = arith.constant 0 : index
    %0 = memref.load %arg1[%c0] : memref<1xi32, #tpu.memory_space<smem>>
    %c8_i32 = arith.constant 8 : i32
    %1 = arith.muli %arg0, %c8_i32 : i32
    %2 = tpu.iota {dimensions = array<i32: 0>} : vector<4x128xi32>
    %3 = tpu.iota {dimensions = array<i32: 1>} : vector<4x128xi32>
    %4 = vector.broadcast %1 : i32 to vector<4x128xi32>
    %5 = arith.addi %4, %2 : vector<4x128xi32>
    %c128_i32 = arith.constant 128 : i32
    %6 = vector.broadcast %c128_i32 : i32 to vector<4x128xi32>
    %7 = arith.muli %5, %6 : vector<4x128xi32>
    %8 = arith.addi %7, %3 : vector<4x128xi32>
    %c-1640531535_i32 = arith.constant -1640531535 : i32
    %9 = vector.broadcast %c-1640531535_i32 : i32 to vector<4x128xi32>
    %10 = arith.muli %8, %9 : vector<4x128xi32>
    %11 = vector.broadcast %0 : i32 to vector<4x128xi32>
    %12 = arith.addi %10, %11 : vector<4x128xi32>
    %c16_i32 = arith.constant 16 : i32
    %13 = vector.broadcast %c16_i32 : i32 to vector<4x128xi32>
    %14 = arith.shrui %12, %13 : vector<4x128xi32>
    %15 = arith.xori %12, %14 : vector<4x128xi32>
    %c-2048144789_i32 = arith.constant -2048144789 : i32
    %16 = vector.broadcast %c-2048144789_i32 : i32 to vector<4x128xi32>
    %17 = arith.muli %15, %16 : vector<4x128xi32>
    %c13_i32 = arith.constant 13 : i32
    %18 = vector.broadcast %c13_i32 : i32 to vector<4x128xi32>
    %19 = arith.shrui %17, %18 : vector<4x128xi32>
    %20 = arith.xori %17, %19 : vector<4x128xi32>
    %c-1028477387_i32 = arith.constant -1028477387 : i32
    %21 = vector.broadcast %c-1028477387_i32 : i32 to vector<4x128xi32>
    %22 = arith.muli %20, %21 : vector<4x128xi32>
    %c16_i32_0 = arith.constant 16 : i32
    %23 = vector.broadcast %c16_i32_0 : i32 to vector<4x128xi32>
    %24 = arith.shrui %22, %23 : vector<4x128xi32>
    %25 = arith.xori %22, %24 : vector<4x128xi32>
    %c1757159915_i32 = arith.constant 1757159915 : i32
    %26 = vector.broadcast %c1757159915_i32 : i32 to vector<4x128xi32>
    %27 = arith.xori %25, %26 : vector<4x128xi32>
    %c16_i32_1 = arith.constant 16 : i32
    %28 = vector.broadcast %c16_i32_1 : i32 to vector<4x128xi32>
    %29 = arith.shrui %27, %28 : vector<4x128xi32>
    %30 = arith.xori %27, %29 : vector<4x128xi32>
    %c-2048144789_i32_2 = arith.constant -2048144789 : i32
    %31 = vector.broadcast %c-2048144789_i32_2 : i32 to vector<4x128xi32>
    %32 = arith.muli %30, %31 : vector<4x128xi32>
    %c13_i32_3 = arith.constant 13 : i32
    %33 = vector.broadcast %c13_i32_3 : i32 to vector<4x128xi32>
    %34 = arith.shrui %32, %33 : vector<4x128xi32>
    %35 = arith.xori %32, %34 : vector<4x128xi32>
    %c-1028477387_i32_4 = arith.constant -1028477387 : i32
    %36 = vector.broadcast %c-1028477387_i32_4 : i32 to vector<4x128xi32>
    %37 = arith.muli %35, %36 : vector<4x128xi32>
    %c16_i32_5 = arith.constant 16 : i32
    %38 = vector.broadcast %c16_i32_5 : i32 to vector<4x128xi32>
    %39 = arith.shrui %37, %38 : vector<4x128xi32>
    %40 = arith.xori %37, %39 : vector<4x128xi32>
    %c48610963_i32 = arith.constant 48610963 : i32
    %41 = vector.broadcast %c48610963_i32 : i32 to vector<4x128xi32>
    %42 = arith.xori %25, %41 : vector<4x128xi32>
    %c16_i32_6 = arith.constant 16 : i32
    %43 = vector.broadcast %c16_i32_6 : i32 to vector<4x128xi32>
    %44 = arith.shrui %42, %43 : vector<4x128xi32>
    %45 = arith.xori %42, %44 : vector<4x128xi32>
    %c-2048144789_i32_7 = arith.constant -2048144789 : i32
    %46 = vector.broadcast %c-2048144789_i32_7 : i32 to vector<4x128xi32>
    %47 = arith.muli %45, %46 : vector<4x128xi32>
    %c13_i32_8 = arith.constant 13 : i32
    %48 = vector.broadcast %c13_i32_8 : i32 to vector<4x128xi32>
    %49 = arith.shrui %47, %48 : vector<4x128xi32>
    %50 = arith.xori %47, %49 : vector<4x128xi32>
    %c-1028477387_i32_9 = arith.constant -1028477387 : i32
    %51 = vector.broadcast %c-1028477387_i32_9 : i32 to vector<4x128xi32>
    %52 = arith.muli %50, %51 : vector<4x128xi32>
    %c16_i32_10 = arith.constant 16 : i32
    %53 = vector.broadcast %c16_i32_10 : i32 to vector<4x128xi32>
    %54 = arith.shrui %52, %53 : vector<4x128xi32>
    %55 = arith.xori %52, %54 : vector<4x128xi32>
    %c8_i32_11 = arith.constant 8 : i32
    %56 = vector.broadcast %c8_i32_11 : i32 to vector<4x128xi32>
    %57 = arith.shrui %40, %56 : vector<4x128xi32>
    %58 = arith.sitofp %57 : vector<4x128xi32> to vector<4x128xf32>
    %cst = arith.constant 5.000000e-01 : f32
    %59 = vector.broadcast %cst : f32 to vector<4x128xf32>
    %60 = arith.addf %58, %59 : vector<4x128xf32>
    %cst_12 = arith.constant 5.96046448E-8 : f32
    %61 = vector.broadcast %cst_12 : f32 to vector<4x128xf32>
    %62 = arith.mulf %60, %61 : vector<4x128xf32>
    %c8_i32_13 = arith.constant 8 : i32
    %63 = vector.broadcast %c8_i32_13 : i32 to vector<4x128xi32>
    %64 = arith.shrui %55, %63 : vector<4x128xi32>
    %65 = arith.sitofp %64 : vector<4x128xi32> to vector<4x128xf32>
    %cst_14 = arith.constant 5.000000e-01 : f32
    %66 = vector.broadcast %cst_14 : f32 to vector<4x128xf32>
    %67 = arith.addf %65, %66 : vector<4x128xf32>
    %cst_15 = arith.constant 5.96046448E-8 : f32
    %68 = vector.broadcast %cst_15 : f32 to vector<4x128xf32>
    %69 = arith.mulf %67, %68 : vector<4x128xf32>
    %70 = math.log %62 : vector<4x128xf32>
    %cst_16 = arith.constant -2.000000e+00 : f32
    %71 = vector.broadcast %cst_16 : f32 to vector<4x128xf32>
    %72 = arith.mulf %71, %70 : vector<4x128xf32>
    %73 = math.sqrt %72 : vector<4x128xf32>
    %cst_17 = arith.constant 6.28318548 : f32
    %74 = vector.broadcast %cst_17 : f32 to vector<4x128xf32>
    %75 = arith.mulf %74, %69 : vector<4x128xf32>
    %76 = math.cos %75 : vector<4x128xf32>
    %77 = arith.mulf %73, %76 : vector<4x128xf32>
    %78 = math.sin %75 : vector<4x128xf32>
    %79 = arith.mulf %73, %78 : vector<4x128xf32>
    %c0_18 = arith.constant 0 : index
    %c0_19 = arith.constant 0 : index
    %80 = vector.load %arg2[%c0_18, %c0_19] : memref<1x128xf32, #tpu.memory_space<vmem>>, vector<1x128xf32>
    %c0_20 = arith.constant 0 : index
    %c0_21 = arith.constant 0 : index
    %81 = vector.load %arg3[%c0_20, %c0_21] : memref<8x128xf32, #tpu.memory_space<vmem>>, vector<4x128xf32>
    %c4 = arith.constant 4 : index
    %c0_22 = arith.constant 0 : index
    %82 = vector.load %arg3[%c4, %c0_22] : memref<8x128xf32, #tpu.memory_space<vmem>>, vector<4x128xf32>
    %83 = vector.broadcast %80 : vector<1x128xf32> to vector<4x128xf32>
    %84 = arith.mulf %77, %83 : vector<4x128xf32>
    %85 = arith.addf %81, %84 : vector<4x128xf32>
    %c0_23 = arith.constant 0 : index
    %c0_24 = arith.constant 0 : index
    %86 = vector.load %arg4[%c0_23, %c0_24] : memref<8x128xf32, #tpu.memory_space<vmem>>, vector<4x128xf32>
    tpu.vector_store %arg4[%c0_23, %c0_24], %85 {strides = array<i32>} : memref<8x128xf32, #tpu.memory_space<vmem>>, vector<4x128xf32>,
    %87 = vector.broadcast %80 : vector<1x128xf32> to vector<4x128xf32>
    %88 = arith.mulf %79, %87 : vector<4x128xf32>
    %89 = arith.addf %82, %88 : vector<4x128xf32>
    %c4_25 = arith.constant 4 : index
    %c0_26 = arith.constant 0 : index
    %90 = vector.load %arg4[%c4_25, %c0_26] : memref<8x128xf32, #tpu.memory_space<vmem>>, vector<4x128xf32>
    tpu.vector_store %arg4[%c4_25, %c0_26], %89 {strides = array<i32>} : memref<8x128xf32, #tpu.memory_space<vmem>>, vector<4x128xf32>,
    return
  }
  func.func @transform_0(%arg0: i32) -> i32 {
    %c0_i32 = arith.constant 0 : i32
    %c0_i32_0 = arith.constant 0 : i32
    return %c0_i32 : i32
  }
  func.func @transform_1(%arg0: i32) -> (i32, i32) {
    %c0_i32 = arith.constant 0 : i32
    %c0_i32_0 = arith.constant 0 : i32
    %c0_i32_1 = arith.constant 0 : i32
    return %c0_i32, %c0_i32_0 : i32, i32
  }
  func.func @transform_2(%arg0: i32) -> (i32, i32) {
    %c0_i32 = arith.constant 0 : i32
    %c0_i32_0 = arith.constant 0 : i32
    return %arg0, %c0_i32 : i32, i32
  }
  func.func @transform_3(%arg0: i32) -> (i32, i32) {
    %c0_i32 = arith.constant 0 : i32
    %c0_i32_0 = arith.constant 0 : i32
    return %arg0, %c0_i32 : i32, i32
  }
}

</mosaic_0001>

<llo_original>
// kernel: tpu_custom_call.1
$region0: #{tpu_custom_call.1}
  #allocation0 [shape = 'u32[]', space=smem, size = 0x4, offset = 0x4, fixed_abs, tag = 'smem constant byte address 0x4 - core index']
  #allocation1 [shape = 'u32[144,128]{1,0:T(1,128)}', space=vmem, size = 0x12000, scoped, tag = 'internal scratch']
  #allocation2 [shape = 's32[1]{0:T(128)S(6)}', space=smem, size = 0x200, scoped, tag = 'scoped memory for tpu_custom_call.1']
  %s0 = inlined_call_operand.<no memory space> [shape: s32[1], index: 0, kind: input, shape index: {}]
  %s1 = inlined_call_operand.vmem [shape: f32[1,128], index: 1, kind: input, shape index: {}]
  %s2 = inlined_call_operand.hbm [shape: f32[8,128], index: 2, kind: input, shape index: {}]
  %s3 = inlined_call_operand.hbm [shape: f32[8,128], index: 3, kind: output, shape index: {}]
  %s4 = sld [smem:[#allocation0]]
  $region26: #{tpu_custom_call.1} parent=0
    _
  %s6 = ssub.s32 1, %s4
  %s7 = scalar_select 0, %s6, %s4
  %8 = sst [smem:[#allocation2]] %s0
  $region1: #{tpu_custom_call.1} parent=0
    #allocation3 [shape = 'u8[4096]{0}', space=vmem, size = 0x1000, scoped, tag = 'input window, operand 2, single buffered']
    #allocation4 [shape = 's32[1]{0}', space=sflag, size = 0x4, scoped, tag = 'scoped memory for tpu_custom_call.1']
    #allocation5 [shape = 's32[1]{0}', space=sflag, size = 0x4, scoped, tag = 'scoped memory for tpu_custom_call.1']
    #allocation6 [shape = 'u8[4096]{0}', space=vmem, size = 0x1000, scoped, tag = 'output window, operand 0, single buffered']
    %9 = vsyncpa [#allocation4], 0
    %10 = vsyncpa [#allocation5], 0
    // Predicated region
    $region2: #{tpu_custom_call.1} parent=1 // pred_check
      _
    $region3: #{tpu_custom_call.1} parent=1 // pred_check_branch
      %12 = sbr.rel (0) target = $region5
    $region4: #{tpu_custom_call.1} parent=1 // pred_region
      _
    $region5: #{tpu_custom_call.1} parent=1 // pred_fallthru
      _
    // Predicated region
    $region6: #{tpu_custom_call.1} parent=1 // pred_check
      _
    $region7: #{tpu_custom_call.1} parent=1 // pred_check_branch
      %14 = sbr.rel (0) target = $region9
    $region8: #{tpu_custom_call.1} parent=1 // pred_region
      _
    $region9: #{tpu_custom_call.1} parent=1 // pred_fallthru
      _
    // Predicated region
    $region10: #{tpu_custom_call.1} parent=1 // pred_check
      _
    $region11: #{tpu_custom_call.1} parent=1 // pred_check_branch
      %16 = sbr.rel (0) target = $region13
    $region12: #{tpu_custom_call.1} parent=1 // pred_region
      %s18 = ssub.s32 128, 128
      %19 = vsyncadd [#allocation4], %s18
      %s21 = sshll.u32 [#allocation3], 4
      %s22 = int_to_ptr.vmem [resolvable:$true] %s21
      %24 = dma.hbm_to_vmem [thread:$0]  %s2, 128, %s22, [#allocation4]
    $region13: #{tpu_custom_call.1} parent=1 // pred_fallthru
      _
    // Predicated region
    $region14: #{tpu_custom_call.1} parent=1 // pred_check
      _
    $region15: #{tpu_custom_call.1} parent=1 // pred_check_branch
      %26 = sbr.rel (0) target = $region17
    $region16: #{tpu_custom_call.1} parent=1 // pred_region
      %27 = dma.done [#allocation4], 128
    $region17: #{tpu_custom_call.1} parent=1 // pred_fallthru
      _
    %s28 = sld [smem:[#allocation2]]
    %s29 = smul.u32 0, 8
    %v30 = vlaneseq
    %v31 = vshrl.u32 %v30, 7
    %v32 = vlaneseq
    %v33 = vand.u32 %v32, 127
    %v34 = vstv %s29
    %v35 = vadd.s32 %v34, %v31
    %v36 = vmul.u32 %v35, 128
    %v37 = vadd.s32 %v36, %v33
    %v38 = vmul.u32 %v37, 2654435761
    %v39 = vstv %s28
    %v40 = vadd.s32 %v38, %v39
    %v41 = vshrl.u32 %v40, 16
    %v42 = vxor.u32 %v40, %v41
    %v43 = vmul.u32 %v42, 2246822507
    %v44 = vshrl.u32 %v43, 13
    %v45 = vxor.u32 %v43, %v44
    %v46 = vmul.u32 %v45, 3266489909
    %v47 = vshrl.u32 %v46, 16
    %v48 = vxor.u32 %v46, %v47
    %v49 = vxor.u32 %v48, 1757159915
    %v50 = vshrl.u32 %v49, 16
    %v51 = vxor.u32 %v49, %v50
    %v52 = vmul.u32 %v51, 2246822507
    %v53 = vshrl.u32 %v52, 13
    %v54 = vxor.u32 %v52, %v53
    %v55 = vmul.u32 %v54, 3266489909
    %v56 = vshrl.u32 %v55, 16
    %v57 = vxor.u32 %v55, %v56
    %v58 = vxor.u32 %v48, 48610963
    %v59 = vshrl.u32 %v58, 16
    %v60 = vxor.u32 %v58, %v59
    %v61 = vmul.u32 %v60, 2246822507
    %v62 = vshrl.u32 %v61, 13
    %v63 = vxor.u32 %v61, %v62
    %v64 = vmul.u32 %v63, 3266489909
    %v65 = vshrl.u32 %v64, 16
    %v66 = vxor.u32 %v64, %v65
    %v67 = vshrl.u32 %v57, 8
    %v68 = vcvt.s32.f32 %v67
    %v69 = vadd.f32 %v68, 0.5
    %v70 = vmul.f32 %v69, 5.9604645e-08
    %v71 = vshrl.u32 %v66, 8
    %v72 = vcvt.s32.f32 %v71
    %v73 = vadd.f32 %v72, 0.5
    %v74 = vmul.f32 %v73, 5.9604645e-08
    %v75 = vlog2.pop %v70
    %v76 = vmul.f32 %v75, 0.6931472
    %v77 = vmul.f32 %v76, -2.0
    %v78 = vrsqrt.pop %v77
    %v79 = vmul.f32 %v77, %v78
    %vm80 = vcmp.eq.f32.partialorder %v77, inf
    %v81 = vsel %vm80, %v77, %v79
    %vm82 = vcmp.eq.f32.partialorder %v77, 0.0
    %v83 = vand.u32 %v77, 2147483648
    %v84 = vsel %vm82, %v83, %v81
    %v85 = vmul.f32 %v74, 6.2831855
    %v86 = vand.u32 2147483647, %v85
    %vm87 = vcmp.le.f32.partialorder %v86, 0.7853982
    %vm88 = vcmp.lt.s32.totalorder %v85, 0
    %v89 = vand.u32 %v85, 2139095040
    %v90 = vshrl.u32 %v89, 23
    %v91 = vsub.s32 %v90, 127
    %v92 = vand.u32 2147483647, %v85
    %v93 = vand.u32 %v92, 8388607
    %v94 = vor.u32 %v93, 8388608
    %v95 = vsub.s32 0, %v94
    %v96 = vadd.s32 %v91, 1
    %vm97 = vcmp.gt.s32.totalorder %v96, 0
    %v98 = vsel %vm97, %v96, 0
    %v99 = vshrl.u32 %v98, 5
    %v100 = vand.u32 %v98, 31
    %v101 = vsub.s32 32, %v100
    %v102 = vshrl.u32 683565275, %v101
    %v103 = vshll.u32 683565275, %v100
    %v104 = vshrl.u32 2475754826, %v101
    %v105 = vor.u32 %v103, %v104
    %v106 = vshll.u32 2475754826, %v100
    %v107 = vshrl.u32 2131351028, %v101
    %v108 = vor.u32 %v106, %v107
    %v109 = vshll.u32 2131351028, %v100
    %v110 = vshrl.u32 2102212464, %v101
    %v111 = vor.u32 %v109, %v110
    %v112 = vshll.u32 2102212464, %v100
    %v113 = vshrl.u32 920167782, %v101
    %v114 = vor.u32 %v112, %v113
    %v115 = vshll.u32 920167782, %v100
    %v116 = vshrl.u32 1326507024, %v101
    %v117 = vor.u32 %v115, %v116
    %vm118 = vcmp.lt.s32.totalorder %v99, 1
    %vm119 = vcmp.lt.s32.totalorder %v99, 2
    %vm120 = vcmp.lt.s32.totalorder %v99, 3
    %vm121 = vcmp.lt.s32.totalorder %v99, 4
    %v122 = vsel %vm118, %v102, %v105
    %v123 = vsel %vm121, %v111, 2102212464
    %v124 = vsel %vm120, %v108, %v123
    %v125 = vsel %vm119, %v122, %v124
    %v126 = vsel %vm118, %v105, %v108
    %v127 = vsel %vm121, %v114, 920167782
    %v128 = vsel %vm120, %v111, %v127
    %v129 = vsel %vm119, %v126, %v128
    %v130 = vsel %vm118, %v108, %v111
    %v131 = vsel %vm121, %v117, 1326507024
    %v132 = vsel %vm120, %v114, %v131
    %v133 = vsel %vm119, %v130, %v132
    %v134 = vshll.u32 %v94, 8
    %v135 = vmul.u32.u64.compose %v134, %v133
    %v136 = vextract.low.u32 %v135
    %v137 = vextract.high.u32 %v135
    %v138 = vmul.u32.u64.compose %v134, %v129
    %v139 = vextract.low.u32 %v138
    %v140 = vextract.high.u32 %v138
    %v141 = vmul.u32 %v134, %v125
    %v142 = vadd.s32 %v137, %v139
    %vm143 = vc.u32 %v137, %v139
    %v144 = vadd.s32 %v140, 1
    %v145 = vsel %vm143, %v144, %v140
    %v146 = vadd.s32 %v141, %v145
    %v147 = vadd.s32 %v146, 536870912
    %v148 = vshrl.u32 %v147, 30
    %v149 = vshll.u32 %v148, 30
    %v150 = vsub.s32 %v146, %v149
    %vm151 = vcmp.lt.s32.totalorder %v150, 0
    %v152 = vsub.s32 0, %v150
    %v153 = vsel %vm151, %v152, %v150
    %v154 = vclz %v153
    %v155 = vsub.s32 %v154, 2
    %vm156 = vcmp.gt.s32.totalorder 0, %v155
    %v157 = vsel %vm156, 0, %v155
    %v158 = vsub.s32 32, %v157
    %v159 = vshll.u32 %v150, %v157
    %v160 = vshrl.u32 %v142, %v158
    %v161 = vor.u32 %v159, %v160
    %v162 = vsub.s32 4294967266, %v157
    %v163 = vadd.s32 %v162, 127
    %v164 = vshll.u32 %v163, 23
    %v165 = vor.u32 4788187, %v164
    %v166 = vand.u32 2147483647, %v165
    %v168 = vcvt.s32.f32 %v161
    %v169 = vmul.f32 %v168, %v166
    %v170 = vxor.u32 %v169, 2147483648
    %v171 = vsel %vm88, %v170, %v169
    %v172 = vsub.s32 4, %v148
    %v173 = vsel %vm88, %v172, %v148
    %v174 = vsel %vm87, %v85, %v171
    %v175 = vsel %vm87, 0, %v173
    %v176 = vcosq.f32.pop %v174
    %v177 = vsinq.f32.pop %v174
    %vm178 = vweird.f32 %v85
    %v179 = vand.u32 %v175, 3
    %vm180 = vcmp.lt.s32.totalorder %v179, 2
    %vm181 = vcmp.eq.s32.totalorder %v179, 0
    %v182 = vxor.u32 %v177, 2147483648
    %v183 = vsel %vm181, %v176, %v182
    %vm184 = vcmp.eq.s32.totalorder %v179, 2
    %v185 = vxor.u32 %v176, 2147483648
    %v186 = vsel %vm184, %v185, %v177
    %v187 = vsel %vm180, %v183, %v186
    %v188 = vsel %vm178, nan, %v187
    %v189 = vmul.f32 %v84, %v188
    %v190 = vand.u32 2147483647, %v85
    %vm191 = vcmp.le.f32.partialorder %v190, 0.7853982
    %vm192 = vcmp.lt.s32.totalorder %v85, 0
    %v193 = vand.u32 %v85, 2139095040
    %v194 = vshrl.u32 %v193, 23
    %v195 = vsub.s32 %v194, 127
    %v196 = vand.u32 2147483647, %v85
    %v197 = vand.u32 %v196, 8388607
    %v198 = vor.u32 %v197, 8388608
    %v199 = vsub.s32 0, %v198
    %v200 = vadd.s32 %v195, 1
    %vm201 = vcmp.gt.s32.totalorder %v200, 0
    %v202 = vsel %vm201, %v200, 0
    %v203 = vshrl.u32 %v202, 5
    %v204 = vand.u32 %v202, 31
    %v205 = vsub.s32 32, %v204
    %v206 = vshrl.u32 683565275, %v205
    %v207 = vshll.u32 683565275, %v204
    %v208 = vshrl.u32 2475754826, %v205
    %v209 = vor.u32 %v207, %v208
    %v210 = vshll.u32 2475754826, %v204
    %v211 = vshrl.u32 2131351028, %v205
    %v212 = vor.u32 %v210, %v211
    %v213 = vshll.u32 2131351028, %v204
    %v214 = vshrl.u32 2102212464, %v205
    %v215 = vor.u32 %v213, %v214
    %v216 = vshll.u32 2102212464, %v204
    %v217 = vshrl.u32 920167782, %v205
    %v218 = vor.u32 %v216, %v217
    %v219 = vshll.u32 920167782, %v204
    %v220 = vshrl.u32 1326507024, %v205
    %v221 = vor.u32 %v219, %v220
    %vm222 = vcmp.lt.s32.totalorder %v203, 1
    %vm223 = vcmp.lt.s32.totalorder %v203, 2
    %vm224 = vcmp.lt.s32.totalorder %v203, 3
    %vm225 = vcmp.lt.s32.totalorder %v203, 4
    %v226 = vsel %vm222, %v206, %v209
    %v227 = vsel %vm225, %v215, 2102212464
    %v228 = vsel %vm224, %v212, %v227
    %v229 = vsel %vm223, %v226, %v228
    %v230 = vsel %vm222, %v209, %v212
    %v231 = vsel %vm225, %v218, 920167782
    %v232 = vsel %vm224, %v215, %v231
    %v233 = vsel %vm223, %v230, %v232
    %v234 = vsel %vm222, %v212, %v215
    %v235 = vsel %vm225, %v221, 1326507024
    %v236 = vsel %vm224, %v218, %v235
    %v237 = vsel %vm223, %v234, %v236
    %v238 = vshll.u32 %v198, 8
    %v239 = vmul.u32.u64.compose %v238, %v237
    %v240 = vextract.low.u32 %v239
    %v241 = vextract.high.u32 %v239
    %v242 = vmul.u32.u64.compose %v238, %v233
    %v243 = vextract.low.u32 %v242
    %v244 = vextract.high.u32 %v242
    %v245 = vmul.u32 %v238, %v229
    %v246 = vadd.s32 %v241, %v243
    %vm247 = vc.u32 %v241, %v243
    %v248 = vadd.s32 %v244, 1
    %v249 = vsel %vm247, %v248, %v244
    %v250 = vadd.s32 %v245, %v249
    %v251 = vadd.s32 %v250, 536870912
    %v252 = vshrl.u32 %v251, 30
    %v253 = vshll.u32 %v252, 30
    %v254 = vsub.s32 %v250, %v253
    %vm255 = vcmp.lt.s32.totalorder %v254, 0
    %v256 = vsub.s32 0, %v254
    %v257 = vsel %vm255, %v256, %v254
    %v258 = vclz %v257
    %v259 = vsub.s32 %v258, 2
    %vm260 = vcmp.gt.s32.totalorder 0, %v259
    %v261 = vsel %vm260, 0, %v259
    %v262 = vsub.s32 32, %v261
    %v263 = vshll.u32 %v254, %v261
    %v264 = vshrl.u32 %v246, %v262
    %v265 = vor.u32 %v263, %v264
    %v266 = vsub.s32 4294967266, %v261
    %v267 = vadd.s32 %v266, 127
    %v268 = vshll.u32 %v267, 23
    %v269 = vor.u32 4788187, %v268
    %v270 = vand.u32 2147483647, %v269
    %v272 = vcvt.s32.f32 %v265
    %v273 = vmul.f32 %v272, %v270
    %v274 = vxor.u32 %v273, 2147483648
    %v275 = vsel %vm192, %v274, %v273
    %v276 = vsub.s32 4, %v252
    %v277 = vsel %vm192, %v276, %v252
    %v278 = vsel %vm191, %v85, %v275
    %v279 = vsel %vm191, 0, %v277
    %v280 = vcosq.f32.pop %v278
    %v281 = vsinq.f32.pop %v278
    %vm282 = vweird.f32 %v85
    %v283 = vadd.s32 %v279, 3
    %v284 = vand.u32 %v283, 3
    %vm285 = vcmp.lt.s32.totalorder %v284, 2
    %vm286 = vcmp.eq.s32.totalorder %v284, 0
    %v287 = vxor.u32 %v281, 2147483648
    %v288 = vsel %vm286, %v280, %v287
    %vm289 = vcmp.eq.s32.totalorder %v284, 2
    %v290 = vxor.u32 %v280, 2147483648
    %v291 = vsel %vm289, %v290, %v281
    %v292 = vsel %vm285, %v288, %v291
    %v293 = vsel %vm282, nan, %v292
    %v294 = vmul.f32 %v84, %v293
    %v295 = vld [vmem:[%s1] sm:$0x1]
    %v296 = vld [vmem:[#allocation3] sm:$0xf]
    %v297 = vld [vmem:[#allocation3 + $0x4] sm:$0xf]
    %v299 = vlaneseq
    %v300 = vshrl.u32 %v299, 7
    %v301 = vsub.s32 0, %v300
    %v302 = vrot.slane %v295, %v301
    %v304 = vmul.f32 %v189, %v302
    %v305 = vadd.f32 %v296, %v304
    %306 = vst [vmem:[#allocation6] sm:$0xf] %v305
    %v307 = vmul.f32 %v294, %v302
    %v308 = vadd.f32 %v297, %v307
    %309 = vst [vmem:[#allocation6 + $0x4] sm:$0xf] %v308
    // Predicated region
    $region18: #{tpu_custom_call.1} parent=1 // pred_check
      _
    $region19: #{tpu_custom_call.1} parent=1 // pred_check_branch
      %311 = sbr.rel (0) target = $region21
    $region20: #{tpu_custom_call.1} parent=1 // pred_region
      %s313 = ssub.s32 128, 128
      %314 = vsyncadd [#allocation5], %s313
      %s316 = sshll.u32 [#allocation6], 4
      %s317 = int_to_ptr.vmem [resolvable:$true] %s316
      %319 = dma.vmem_to_hbm [thread:$0]  %s317, 128, %s3, [#allocation5]
    $region21: #{tpu_custom_call.1} parent=1 // pred_fallthru
      _
    // Predicated region
    $region22: #{tpu_custom_call.1} parent=1 // pred_check
      _
    $region23: #{tpu_custom_call.1} parent=1 // pred_check_branch
      %321 = sbr.rel (0) target = $region25
    $region24: #{tpu_custom_call.1} parent=1 // pred_region
      %322 = dma.done [#allocation5], 128
    $region25: #{tpu_custom_call.1} parent=1 // pred_fallthru
      _
    %323 = vsyncpa [#allocation4], 1
    %324 = vsyncpa [#allocation5], 1

</llo_original>
